<compile_context>
chip_gen: v7x
topology: tpu7x:2x2x1
jax: 0.10.0
libtpu: 0.0.40
codegen_flags: <defaults>
</compile_context>

<pallas_src>
import functools
from typing import NamedTuple

import jax
import jax.numpy as jnp
import numpy as np
from jax.experimental import pallas as pl
from jax.experimental.pallas import tpu as pltpu


def _round_up(x, m):
    return (x + m - 1) // m * m


# ----------------------------------------------------------------------------
# Load-time weight preparation (pure function of the static weights)
# ----------------------------------------------------------------------------
class GPTQPacked(NamedTuple):
    qweight: jax.Array       # (KP, N_pad) int32, slab-major repacked
    scales: jax.Array        # (G, N_pad) float32
    scale_zeros: jax.Array   # (G, N_pad) float32  (= zeros * scales)
    out_features: int        # original N


def gptq_prepack(qweight, scales, qzeros, *, bits, groupsize):
    """Repack GPTQ weight-side buffers for the Pallas kernel (do once at load).

    Bitfield j of repacked word p holds logical in-feature row j*KP + p, so
    the kernel's shift-j unpack writes KP contiguous logical rows and the
    activations need no per-call permutation."""
    if bits not in (2, 4, 8):
        # TODO(synk): 3/5/6/7-bit general_unpack_on_row path not implemented.
        raise NotImplementedError("only 2/4/8-bit packing supported here")
    pack = 32 // bits
    maxq = (1 << bits) - 1
    KP, N = qweight.shape
    K = KP * pack
    G = scales.shape[0]
    assert K % groupsize == 0 and groupsize % pack == 0
    assert G * groupsize == K

    shifts = (jnp.arange(pack, dtype=jnp.uint32) * bits).astype(jnp.uint32)

    # unpack (low bits first): logical row p*pack + j <- bits of word p at j*bits
    qw_u = jax.lax.bitcast_convert_type(qweight, jnp.uint32)
    w = jnp.bitwise_and(qw_u[:, None, :] >> shifts[None, :, None],
                        jnp.uint32(maxq))                 # (KP, pack, N)
    w = w.reshape(K, N)                                   # logical row order
    # repack slab-major: new word p carries logical row j*KP + p in bitfield j
    w = w.reshape(pack, KP, N)
    parts = [w[j] << jnp.uint32(j * bits) for j in range(pack)]
    qw2 = functools.reduce(jnp.bitwise_or, parts)
    qw2 = jax.lax.bitcast_convert_type(qw2.astype(jnp.uint32), jnp.int32)

    # zero points packed along out_features (GPTQ, no AutoGPTQ '+1')
    qz_u = jax.lax.bitcast_convert_type(qzeros, jnp.uint32)
    zeros = jnp.bitwise_and(qz_u[:, :, None] >> shifts[None, None, :],
                            jnp.uint32(maxq)).reshape(G, N).astype(jnp.float32)
    scales_f32 = scales.astype(jnp.float32)
    scale_zeros = zeros * scales_f32

    # pad out_features to a lane-dense multiple of 128
    N_pad = _round_up(N, 128)
    if N_pad != N:
        padn = N_pad - N
        qw2 = jnp.pad(qw2, ((0, 0), (0, padn)))
        scales_f32 = jnp.pad(scales_f32, ((0, 0), (0, padn)))
        scale_zeros = jnp.pad(scale_zeros, ((0, 0), (0, padn)))
    return GPTQPacked(qw2, scales_f32, scale_zeros, N)


# ----------------------------------------------------------------------------
# Pallas kernel
# ----------------------------------------------------------------------------
def _gptq_matmul_kernel(x_ref, qw_ref, sc_ref, sz_ref, b_ref, o_ref, w_ref, *,
                        bits, kp, segs):
    # x_ref : (TM, K)   bf16   activations (natural in-feature order)
    # qw_ref: (KP, TN)  int32  slab-major repacked quantized weights
    # sc_ref: (G, TN)   f32    per-group scales
    # sz_ref: (G, TN)   f32    per-group scale*zero
    # b_ref : (1, TN)   f32    bias
    # o_ref : (TM, TN)  out dtype
    # w_ref : (K, TN)   bf16   scratch: dequantized weight tile, logical order
    pack = 32 // bits
    maxq = (1 << bits) - 1
    m_idx = pl.program_id(1)

    def epilogue(acc):
        o_ref[...] = (acc + b_ref[...]).astype(o_ref.dtype)

    # First M tile of each N tile: dequantize the (K, TN) weight tile into the
    # bf16 scratch, interleaving per-slab dequant (VPU) with per-slab partial
    # matmuls (MXU) so the scheduler overlaps them.
    @pl.when(m_idx == 0)
    def _dequant_and_matmul():
        acc = jnp.zeros(o_ref.shape, jnp.float32)
        for j in range(pack):                                  # static unroll
            qw = qw_ref[...]
            shifted = jnp.right_shift(qw, j * bits) if j else qw
            wj = jnp.bitwise_and(shifted, maxq).astype(jnp.float32)
            # slab j = logical rows [j*kp, (j+1)*kp); scales applied per group
            # block (no (KP, TN) broadcast temporaries).
            for g, r0, r1 in segs[j]:                          # static
                w_ref[j * kp + r0:j * kp + r1, :] = (
                    sc_ref[g:g + 1, :] * wj[r0:r1, :] - sz_ref[g:g + 1, :]
                ).astype(w_ref.dtype)
            acc += jnp.dot(x_ref[:, j * kp:(j + 1) * kp],
                           w_ref[j * kp:(j + 1) * kp, :],
                           preferred_element_type=jnp.float32)
        epilogue(acc)

    # Subsequent M tiles reuse the dequantized scratch: one full-K matmul.
    @pl.when(m_idx != 0)
    def _matmul():
        epilogue(jnp.dot(x_ref[...], w_ref[...],
                         preferred_element_type=jnp.float32))


# ----------------------------------------------------------------------------
# VMEM-budget-aware tiling
# ----------------------------------------------------------------------------
def _vmem_capacity_bytes():
    try:
        info = pltpu.get_tpu_info()
        for attr in ("vmem_capacity_bytes", "vmem_size_bytes", "vmem_bytes"):
            v = getattr(info, attr, None)
            if v:
                return int(v)
    except Exception:
        pass
    return 64 << 20       # conservative (v7x-sized) default


def _working_set_bytes(tm, tn, K, KP, G, out_bytes):
    scratch = K * tn * 2                   # (K, TN) bf16 dequant scratch
    x_buf = 2 * tm * K * 2                 # double-buffered bf16 x block
    qw_buf = 2 * KP * tn * 4               # double-buffered packed weights
    meta = 2 * (2 * G * tn * 4 + tn * 4)   # scales + scale_zeros + bias
    out_buf = 2 * tm * tn * out_bytes      # double-buffered output tile
    temp = KP * tn * 8                     # dequant temporaries (int32 + f32 slab)
    return scratch + x_buf + qw_buf + meta + out_buf + temp


def _select_tiles(M, K, KP, G, N_pad, out_bytes, budget):
    n_cands = [t for t in (1024, 512, 256, 128) if N_pad % t == 0] or [N_pad]
    # keep >= 2 N tiles when possible so the "parallel" axis feeds both
    # TensorCores on megacore parts (v7x).
    two = [t for t in n_cands if N_pad // t >= 2]
    if two:
        n_cands = two
    m_cands = [t for t in (512, 256, 128, 64, 32, 16)
               if t <= _round_up(M, 16)] or [16]
    m_goal = min(128, m_cands[0])

    for tn in n_cands:                      # prefer lane-widest feasible tiles
        for tm in m_cands:
            if tm >= m_goal and _working_set_bytes(tm, tn, K, KP, G,
                                                   out_bytes) <= budget:
                return tm, tn
    for tn in n_cands:                      # relax the M-tile goal
        for tm in m_cands:
            if _working_set_bytes(tm, tn, K, KP, G, out_bytes) <= budget:
                return tm, tn
    return m_cands[-1], n_cands[-1]


# ----------------------------------------------------------------------------
# Wrapper (forward pass)
# ----------------------------------------------------------------------------
def quant_linear_gptq(x, qweight, scales, qzeros, bias, *, bits, groupsize,
                      prepacked=None, out_dtype=None, tile_m=None, tile_n=None):
    if prepacked is None:
        # TODO(synk): cache this per layer (load time); re-packing the static
        # weights every call wastes HBM bandwidth.
        prepacked = gptq_prepack(qweight, scales, qzeros, bits=bits,
                                 groupsize=groupsize)
    # TODO(synk): act_order (g_idx-permuted groups) path not implemented; this
    # is the default g_idx=None dequant path used by the module's forward.
    pack = 32 // bits

    orig_shape = x.shape
    K = orig_shape[-1]
    KP, N_pad = prepacked.qweight.shape
    N = prepacked.out_features
    G = prepacked.scales.shape[0]
    assert KP * pack == K and G * groupsize == K

    out_dtype = x.dtype if out_dtype is None else out_dtype
    out_bytes = jnp.dtype(out_dtype).itemsize

    x2 = x.reshape(-1, K).astype(jnp.bfloat16)     # natural K order, no permute
    M = x2.shape[0]

    if bias is None:
        bias2 = jnp.zeros((1, N_pad), jnp.float32)
    else:
        bias2 = jnp.pad(bias.reshape(1, N).astype(jnp.float32),
                        ((0, 0), (0, N_pad - N)))

    # --- tiling, sized to the chip's VMEM ------------------------------------
    cap = _vmem_capacity_bytes()
    budget = (cap * 3) // 4
    auto_tm, auto_tn = _select_tiles(M, K, KP, G, N_pad, out_bytes, budget)
    tile_m = auto_tm if tile_m is None else tile_m
    tile_n = auto_tn if tile_n is None else tile_n
    assert N_pad % tile_n == 0

    M_pad = _round_up(M, tile_m)
    if M_pad != M:
        x2 = jnp.pad(x2, ((0, M_pad - M), (0, 0)))

    # static (group, row0, row1) segments of each shift-slab
    # (slab j = logical rows [j*KP, (j+1)*KP) of the dequantized weight).
    segs = []
    for j in range(pack):
        lo, hi = j * KP, (j + 1) * KP
        slab = []
        for g in range(lo // groupsize, (hi - 1) // groupsize + 1):
            slab.append((g, max(lo, g * groupsize) - lo,
                         min(hi, (g + 1) * groupsize) - lo))
        segs.append(tuple(slab))
    segs = tuple(segs)

    kernel = functools.partial(_gptq_matmul_kernel, bits=bits, kp=KP, segs=segs)

    need = _working_set_bytes(tile_m, tile_n, K, KP, G, out_bytes)
    vmem_limit = int(min(cap - (4 << 20), max(need + (8 << 20), 32 << 20)))

    out = pl.pallas_call(
        kernel,
        out_shape=jax.ShapeDtypeStruct((M_pad, N_pad), out_dtype),
        grid_spec=pltpu.PrefetchScalarGridSpec(
            num_scalar_prefetch=0,
            grid=(N_pad // tile_n, M_pad // tile_m),      # (n outer, m inner)
            in_specs=[
                pl.BlockSpec((tile_m, K), lambda n, m: (m, 0)),    # x (bf16)
                pl.BlockSpec((KP, tile_n), lambda n, m: (0, n)),   # packed w
                pl.BlockSpec((G, tile_n), lambda n, m: (0, n)),    # scales
                pl.BlockSpec((G, tile_n), lambda n, m: (0, n)),    # scale*zero
                pl.BlockSpec((1, tile_n), lambda n, m: (0, n)),    # bias
            ],
            out_specs=pl.BlockSpec((tile_m, tile_n), lambda n, m: (m, n)),
            scratch_shapes=[pltpu.VMEM((K, tile_n), jnp.bfloat16)],
        ),
        compiler_params=pltpu.CompilerParams(
            dimension_semantics=("parallel", "arbitrary"),
            vmem_limit_bytes=vmem_limit),
    )(x2, prepacked.qweight, prepacked.scales, prepacked.scale_zeros, bias2)

    if M_pad != M:
        out = out[:M]
    if N_pad != N:
        out = out[:, :N]
    return out.reshape(orig_shape[:-1] + (N,))


# ----------------------------------------------------------------------------
# Deterministic synthetic parameter construction (mirrors module buffers)
# ----------------------------------------------------------------------------
def _pack_rows(vals, bits):
    # pack along axis 0 (in_features), low bits first -> int32 (K*bits/32, N)
    pack = 32 // bits
    k, n = vals.shape
    v = vals.reshape(k // pack, pack, n).astype(jnp.uint32)
    shifts = (jnp.arange(pack, dtype=jnp.uint32) * bits)[None, :, None]
    packed = jnp.sum(v << shifts, axis=1, dtype=jnp.uint32)
    return jax.lax.bitcast_convert_type(packed, jnp.int32)


def _pack_cols(vals, bits):
    # pack along axis 1 (out_features), low bits first -> int32 (G, N*bits/32)
    pack = 32 // bits
    g, n = vals.shape
    v = vals.reshape(g, n // pack, pack).astype(jnp.uint32)
    shifts = (jnp.arange(pack, dtype=jnp.uint32) * bits)[None, None, :]
    packed = jnp.sum(v << shifts, axis=2, dtype=jnp.uint32)
    return jax.lax.bitcast_convert_type(packed, jnp.int32)


def _dequantize_ref(qweight, scales, qzeros, bits, groupsize):
    # pure-JAX port of DequantizeLinearBlockWise (g_idx=None path)
    pack = 32 // bits
    maxq = (1 << bits) - 1
    shifts = jnp.arange(pack, dtype=jnp.int32) * bits
    sc = scales.reshape(-1, 1, scales.shape[-1]).astype(jnp.float32)
    zeros = jnp.bitwise_and(
        jnp.right_shift(qzeros[:, :, None], shifts[None, None, :]), maxq)
    zeros = zeros.reshape(-1, 1, zeros.shape[1] * pack)
    weight = jnp.bitwise_and(
        jnp.right_shift(qweight[:, None, :], shifts[None, :, None]), maxq)
    scale_zeros = zeros * sc
    weight = weight.reshape(-1, groupsize, weight.shape[-1])
    weight = sc * weight - scale_zeros
    return weight.reshape(-1, weight.shape[2])


if __name__ == "__main__":
    # Shapes consistent with QuantLinearGPTQ(bits=4, groupsize=32,
    # infeatures=64, outfeatures=128, bias=True); input (batch=2, seq=8, K).
    bits = 4
    infeatures = 64
    outfeatures = 128
    groupsize = 32
    G = infeatures // groupsize

    key = jax.random.PRNGKey(0)
    k1, k2, k3, k4, k5 = jax.random.split(key, 5)

    w_int = jax.random.randint(k1, (infeatures, outfeatures), 0, 2 ** bits,
                               dtype=jnp.int32)
    z_int = jax.random.randint(k2, (G, outfeatures), 0, 2 ** bits,
                               dtype=jnp.int32)
    scales = jax.random.uniform(k3, (G, outfeatures), jnp.float32, 0.01, 0.1)
    bias = jax.random.normal(k4, (outfeatures,), jnp.float32)
    x = jax.random.normal(k5, (2, 8, infeatures), jnp.float32)

    qweight = _pack_rows(w_int, bits)     # (infeatures//32*bits, outfeatures)
    qzeros = _pack_cols(z_int, bits)      # (G, outfeatures//32*bits)

    # one-time (load-time) weight-side preparation, then forward
    packed = gptq_prepack(qweight, scales, qzeros, bits=bits,
                          groupsize=groupsize)
    out = quant_linear_gptq(x, qweight, scales, qzeros, bias,
                            bits=bits, groupsize=groupsize, prepacked=packed)
    out = jax.block_until_ready(out)

    # References computed from the ORIGINAL packed buffers (module convention)
    w_deq = _dequantize_ref(qweight, scales, qzeros, bits, groupsize)  # (K, N)
    x2 = x.reshape(-1, infeatures)
    out2 = np.asarray(out).reshape(-1, outfeatures)

    # 1) bf16-matmul-matched reference (same numerics as the kernel path).
    ref_bf16 = jnp.dot(x2.astype(jnp.bfloat16), w_deq.astype(jnp.bfloat16),
                       preferred_element_type=jnp.float32) + bias[None, :]
    np.testing.assert_allclose(out2, np.asarray(ref_bf16), rtol=1e-3, atol=1e-3)

    # 2) full-precision module semantics (loose tolerance for bf16 MXU input).
    ref_f32 = x2 @ w_deq + bias[None, :]
    np.testing.assert_allclose(out2, np.asarray(ref_f32), rtol=5e-2, atol=2e-1)

    print("KERNEL_OK")
</pallas_src>

<mosaic_0001>
module attributes {stable_mosaic.version = 11 : i64} {
  func.func @_gptq_matmul_kernel(%arg0: i32, %arg1: i32, %arg2: memref<16x64xbf16, #tpu.memory_space<vmem>>, %arg3: memref<8x128xi32, #tpu.memory_space<vmem>>, %arg4: memref<2x128xf32, #tpu.memory_space<vmem>>, %arg5: memref<2x128xf32, #tpu.memory_space<vmem>>, %arg6: memref<1x128xf32, #tpu.memory_space<vmem>>, %arg7: memref<16x128xf32, #tpu.memory_space<vmem>>, %arg8: memref<64x128xbf16, #tpu.memory_space<vmem>>) attributes {dimension_semantics = [#tpu.dimension_semantics<parallel>, #tpu.dimension_semantics<arbitrary>], iteration_bounds = array<i64: 1, 1>, scalar_prefetch = 0 : i64, scratch_operands = 1 : i64, tpu.core_type = #tpu.core_type<tc>, window_params = [{transform_indices = @transform_0, window_bounds = array<i64: 16, 64>}, {transform_indices = @transform_1, window_bounds = array<i64: 8, 128>}, {transform_indices = @transform_2, window_bounds = array<i64: 2, 128>}, {transform_indices = @transform_3, window_bounds = array<i64: 2, 128>}, {transform_indices = @transform_4, window_bounds = array<i64: 1, 128>}, {transform_indices = @transform_5, window_bounds = array<i64: 16, 128>}]} {
    %c0_i32 = arith.constant 0 : i32
    %0 = arith.cmpi eq, %arg1, %c0_i32 : i32
    %1 = arith.extui %0 : i1 to i32
    %c0_i32_0 = arith.constant 0 : i32
    %2 = arith.cmpi ne, %1, %c0_i32_0 : i32
    scf.if %2 {
      %cst = arith.constant 0.000000e+00 : f32
      %6 = vector.broadcast %cst : f32 to vector<16x128xf32>
      %c0 = arith.constant 0 : index
      %c0_3 = arith.constant 0 : index
      %7 = vector.load %arg3[%c0, %c0_3] : memref<8x128xi32, #tpu.memory_space<vmem>>, vector<8x128xi32>
      %c15_i32 = arith.constant 15 : i32
      %8 = vector.broadcast %c15_i32 : i32 to vector<8x128xi32>
      %9 = arith.andi %7, %8 : vector<8x128xi32>
      %10 = arith.sitofp %9 : vector<8x128xi32> to vector<8x128xf32>
      %c0_4 = arith.constant 0 : index
      %c0_5 = arith.constant 0 : index
      %11 = vector.load %arg4[%c0_4, %c0_5] : memref<2x128xf32, #tpu.memory_space<vmem>>, vector<1x128xf32>
      %12 = vector.broadcast %11 : vector<1x128xf32> to vector<8x128xf32>
      %13 = arith.mulf %12, %10 : vector<8x128xf32>
      %c0_6 = arith.constant 0 : index
      %c0_7 = arith.constant 0 : index
      %14 = vector.load %arg5[%c0_6, %c0_7] : memref<2x128xf32, #tpu.memory_space<vmem>>, vector<1x128xf32>
      %15 = vector.broadcast %14 : vector<1x128xf32> to vector<8x128xf32>
      %16 = arith.subf %13, %15 : vector<8x128xf32>
      %17 = arith.truncf %16 : vector<8x128xf32> to vector<8x128xbf16>
      %c0_8 = arith.constant 0 : index
      %c0_9 = arith.constant 0 : index
      %18 = vector.load %arg8[%c0_8, %c0_9] : memref<64x128xbf16, #tpu.memory_space<vmem>>, vector<8x128xbf16>
      tpu.vector_store %arg8[%c0_8, %c0_9], %17 {strides = array<i32>} : memref<64x128xbf16, #tpu.memory_space<vmem>>, vector<8x128xbf16>,
      %c0_10 = arith.constant 0 : index
      %c0_11 = arith.constant 0 : index
      %19 = vector.load %arg2[%c0_10, %c0_11] : memref<16x64xbf16, #tpu.memory_space<vmem>>, vector<16x8xbf16>
      %c0_12 = arith.constant 0 : index
      %c0_13 = arith.constant 0 : index
      %20 = vector.load %arg8[%c0_12, %c0_13] : memref<64x128xbf16, #tpu.memory_space<vmem>>, vector<8x128xbf16>
      %cst_14 = arith.constant dense<0.000000e+00> : vector<16x128xf32>
      %21 = tpu.matmul %19, %20, %cst_14 {dimension_numbers = #tpu.dot_dimension_numbers<[1], [0], [0], [1], [0, 0, 1, 1], [], []>} : vector<16x8xbf16>, vector<8x128xbf16>, vector<16x128xf32> -> vector<16x128xf32>
      %22 = arith.addf %6, %21 : vector<16x128xf32>
      %c0_15 = arith.constant 0 : index
      %c0_16 = arith.constant 0 : index
      %23 = vector.load %arg3[%c0_15, %c0_16] : memref<8x128xi32, #tpu.memory_space<vmem>>, vector<8x128xi32>
      %c4_i32 = arith.constant 4 : i32
      %24 = vector.broadcast %c4_i32 : i32 to vector<8x128xi32>
      %25 = arith.shrsi %23, %24 : vector<8x128xi32>
      %c15_i32_17 = arith.constant 15 : i32
      %26 = vector.broadcast %c15_i32_17 : i32 to vector<8x128xi32>
      %27 = arith.andi %25, %26 : vector<8x128xi32>
      %28 = arith.sitofp %27 : vector<8x128xi32> to vector<8x128xf32>
      %c0_18 = arith.constant 0 : index
      %c0_19 = arith.constant 0 : index
      %29 = vector.load %arg4[%c0_18, %c0_19] : memref<2x128xf32, #tpu.memory_space<vmem>>, vector<1x128xf32>
      %30 = vector.broadcast %29 : vector<1x128xf32> to vector<8x128xf32>
      %31 = arith.mulf %30, %28 : vector<8x128xf32>
      %c0_20 = arith.constant 0 : index
      %c0_21 = arith.constant 0 : index
      %32 = vector.load %arg5[%c0_20, %c0_21] : memref<2x128xf32, #tpu.memory_space<vmem>>, vector<1x128xf32>
      %33 = vector.broadcast %32 : vector<1x128xf32> to vector<8x128xf32>
      %34 = arith.subf %31, %33 : vector<8x128xf32>
      %35 = arith.truncf %34 : vector<8x128xf32> to vector<8x128xbf16>
      %c8 = arith.constant 8 : index
      %c0_22 = arith.constant 0 : index
      %36 = vector.load %arg8[%c8, %c0_22] : memref<64x128xbf16, #tpu.memory_space<vmem>>, vector<8x128xbf16>
      tpu.vector_store %arg8[%c8, %c0_22], %35 {strides = array<i32>} : memref<64x128xbf16, #tpu.memory_space<vmem>>, vector<8x128xbf16>,
      %c0_23 = arith.constant 0 : index
      %c8_24 = arith.constant 8 : index
      %37 = vector.load %arg2[%c0_23, %c8_24] : memref<16x64xbf16, #tpu.memory_space<vmem>>, vector<16x8xbf16>
      %c8_25 = arith.constant 8 : index
      %c0_26 = arith.constant 0 : index
      %38 = vector.load %arg8[%c8_25, %c0_26] : memref<64x128xbf16, #tpu.memory_space<vmem>>, vector<8x128xbf16>
      %cst_27 = arith.constant dense<0.000000e+00> : vector<16x128xf32>
      %39 = tpu.matmul %37, %38, %cst_27 {dimension_numbers = #tpu.dot_dimension_numbers<[1], [0], [0], [1], [0, 0, 1, 1], [], []>} : vector<16x8xbf16>, vector<8x128xbf16>, vector<16x128xf32> -> vector<16x128xf32>
      %40 = arith.addf %22, %39 : vector<16x128xf32>
      %c0_28 = arith.constant 0 : index
      %c0_29 = arith.constant 0 : index
      %41 = vector.load %arg3[%c0_28, %c0_29] : memref<8x128xi32, #tpu.memory_space<vmem>>, vector<8x128xi32>
      %c8_i32 = arith.constant 8 : i32
      %42 = vector.broadcast %c8_i32 : i32 to vector<8x128xi32>
      %43 = arith.shrsi %41, %42 : vector<8x128xi32>
      %c15_i32_30 = arith.constant 15 : i32
      %44 = vector.broadcast %c15_i32_30 : i32 to vector<8x128xi32>
      %45 = arith.andi %43, %44 : vector<8x128xi32>
      %46 = arith.sitofp %45 : vector<8x128xi32> to vector<8x128xf32>
      %c0_31 = arith.constant 0 : index
      %c0_32 = arith.constant 0 : index
      %47 = vector.load %arg4[%c0_31, %c0_32] : memref<2x128xf32, #tpu.memory_space<vmem>>, vector<1x128xf32>
      %48 = vector.broadcast %47 : vector<1x128xf32> to vector<8x128xf32>
      %49 = arith.mulf %48, %46 : vector<8x128xf32>
      %c0_33 = arith.constant 0 : index
      %c0_34 = arith.constant 0 : index
      %50 = vector.load %arg5[%c0_33, %c0_34] : memref<2x128xf32, #tpu.memory_space<vmem>>, vector<1x128xf32>
      %51 = vector.broadcast %50 : vector<1x128xf32> to vector<8x128xf32>
      %52 = arith.subf %49, %51 : vector<8x128xf32>
      %53 = arith.truncf %52 : vector<8x128xf32> to vector<8x128xbf16>
      %c16 = arith.constant 16 : index
      %c0_35 = arith.constant 0 : index
      %54 = vector.load %arg8[%c16, %c0_35] : memref<64x128xbf16, #tpu.memory_space<vmem>>, vector<8x128xbf16>
      tpu.vector_store %arg8[%c16, %c0_35], %53 {strides = array<i32>} : memref<64x128xbf16, #tpu.memory_space<vmem>>, vector<8x128xbf16>,
      %c0_36 = arith.constant 0 : index
      %c16_37 = arith.constant 16 : index
      %55 = vector.load %arg2[%c0_36, %c16_37] : memref<16x64xbf16, #tpu.memory_space<vmem>>, vector<16x8xbf16>
      %c16_38 = arith.constant 16 : index
      %c0_39 = arith.constant 0 : index
      %56 = vector.load %arg8[%c16_38, %c0_39] : memref<64x128xbf16, #tpu.memory_space<vmem>>, vector<8x128xbf16>
      %cst_40 = arith.constant dense<0.000000e+00> : vector<16x128xf32>
      %57 = tpu.matmul %55, %56, %cst_40 {dimension_numbers = #tpu.dot_dimension_numbers<[1], [0], [0], [1], [0, 0, 1, 1], [], []>} : vector<16x8xbf16>, vector<8x128xbf16>, vector<16x128xf32> -> vector<16x128xf32>
      %58 = arith.addf %40, %57 : vector<16x128xf32>
      %c0_41 = arith.constant 0 : index
      %c0_42 = arith.constant 0 : index
      %59 = vector.load %arg3[%c0_41, %c0_42] : memref<8x128xi32, #tpu.memory_space<vmem>>, vector<8x128xi32>
      %c12_i32 = arith.constant 12 : i32
      %60 = vector.broadcast %c12_i32 : i32 to vector<8x128xi32>
      %61 = arith.shrsi %59, %60 : vector<8x128xi32>
      %c15_i32_43 = arith.constant 15 : i32
      %62 = vector.broadcast %c15_i32_43 : i32 to vector<8x128xi32>
      %63 = arith.andi %61, %62 : vector<8x128xi32>
      %64 = arith.sitofp %63 : vector<8x128xi32> to vector<8x128xf32>
      %c0_44 = arith.constant 0 : index
      %c0_45 = arith.constant 0 : index
      %65 = vector.load %arg4[%c0_44, %c0_45] : memref<2x128xf32, #tpu.memory_space<vmem>>, vector<1x128xf32>
      %66 = vector.broadcast %65 : vector<1x128xf32> to vector<8x128xf32>
      %67 = arith.mulf %66, %64 : vector<8x128xf32>
      %c0_46 = arith.constant 0 : index
      %c0_47 = arith.constant 0 : index
      %68 = vector.load %arg5[%c0_46, %c0_47] : memref<2x128xf32, #tpu.memory_space<vmem>>, vector<1x128xf32>
      %69 = vector.broadcast %68 : vector<1x128xf32> to vector<8x128xf32>
      %70 = arith.subf %67, %69 : vector<8x128xf32>
      %71 = arith.truncf %70 : vector<8x128xf32> to vector<8x128xbf16>
      %c24 = arith.constant 24 : index
      %c0_48 = arith.constant 0 : index
      %72 = vector.load %arg8[%c24, %c0_48] : memref<64x128xbf16, #tpu.memory_space<vmem>>, vector<8x128xbf16>
      tpu.vector_store %arg8[%c24, %c0_48], %71 {strides = array<i32>} : memref<64x128xbf16, #tpu.memory_space<vmem>>, vector<8x128xbf16>,
      %c0_49 = arith.constant 0 : index
      %c24_50 = arith.constant 24 : index
      %73 = vector.load %arg2[%c0_49, %c24_50] : memref<16x64xbf16, #tpu.memory_space<vmem>>, vector<16x8xbf16>
      %c24_51 = arith.constant 24 : index
      %c0_52 = arith.constant 0 : index
      %74 = vector.load %arg8[%c24_51, %c0_52] : memref<64x128xbf16, #tpu.memory_space<vmem>>, vector<8x128xbf16>
      %cst_53 = arith.constant dense<0.000000e+00> : vector<16x128xf32>
      %75 = tpu.matmul %73, %74, %cst_53 {dimension_numbers = #tpu.dot_dimension_numbers<[1], [0], [0], [1], [0, 0, 1, 1], [], []>} : vector<16x8xbf16>, vector<8x128xbf16>, vector<16x128xf32> -> vector<16x128xf32>
      %76 = arith.addf %58, %75 : vector<16x128xf32>
      %c0_54 = arith.constant 0 : index
      %c0_55 = arith.constant 0 : index
      %77 = vector.load %arg3[%c0_54, %c0_55] : memref<8x128xi32, #tpu.memory_space<vmem>>, vector<8x128xi32>
      %c16_i32 = arith.constant 16 : i32
      %78 = vector.broadcast %c16_i32 : i32 to vector<8x128xi32>
      %79 = arith.shrsi %77, %78 : vector<8x128xi32>
      %c15_i32_56 = arith.constant 15 : i32
      %80 = vector.broadcast %c15_i32_56 : i32 to vector<8x128xi32>
      %81 = arith.andi %79, %80 : vector<8x128xi32>
      %82 = arith.sitofp %81 : vector<8x128xi32> to vector<8x128xf32>
      %c1 = arith.constant 1 : index
      %c0_57 = arith.constant 0 : index
      %83 = vector.load %arg4[%c1, %c0_57] : memref<2x128xf32, #tpu.memory_space<vmem>>, vector<1x128xf32>
      %84 = vector.broadcast %83 : vector<1x128xf32> to vector<8x128xf32>
      %85 = arith.mulf %84, %82 : vector<8x128xf32>
      %c1_58 = arith.constant 1 : index
      %c0_59 = arith.constant 0 : index
      %86 = vector.load %arg5[%c1_58, %c0_59] : memref<2x128xf32, #tpu.memory_space<vmem>>, vector<1x128xf32>
      %87 = vector.broadcast %86 : vector<1x128xf32> to vector<8x128xf32>
      %88 = arith.subf %85, %87 : vector<8x128xf32>
      %89 = arith.truncf %88 : vector<8x128xf32> to vector<8x128xbf16>
      %c32 = arith.constant 32 : index
      %c0_60 = arith.constant 0 : index
      %90 = vector.load %arg8[%c32, %c0_60] : memref<64x128xbf16, #tpu.memory_space<vmem>>, vector<8x128xbf16>
      tpu.vector_store %arg8[%c32, %c0_60], %89 {strides = array<i32>} : memref<64x128xbf16, #tpu.memory_space<vmem>>, vector<8x128xbf16>,
      %c0_61 = arith.constant 0 : index
      %c32_62 = arith.constant 32 : index
      %91 = vector.load %arg2[%c0_61, %c32_62] : memref<16x64xbf16, #tpu.memory_space<vmem>>, vector<16x8xbf16>
      %c32_63 = arith.constant 32 : index
      %c0_64 = arith.constant 0 : index
      %92 = vector.load %arg8[%c32_63, %c0_64] : memref<64x128xbf16, #tpu.memory_space<vmem>>, vector<8x128xbf16>
      %cst_65 = arith.constant dense<0.000000e+00> : vector<16x128xf32>
      %93 = tpu.matmul %91, %92, %cst_65 {dimension_numbers = #tpu.dot_dimension_numbers<[1], [0], [0], [1], [0, 0, 1, 1], [], []>} : vector<16x8xbf16>, vector<8x128xbf16>, vector<16x128xf32> -> vector<16x128xf32>
      %94 = arith.addf %76, %93 : vector<16x128xf32>
      %c0_66 = arith.constant 0 : index
      %c0_67 = arith.constant 0 : index
      %95 = vector.load %arg3[%c0_66, %c0_67] : memref<8x128xi32, #tpu.memory_space<vmem>>, vector<8x128xi32>
      %c20_i32 = arith.constant 20 : i32
      %96 = vector.broadcast %c20_i32 : i32 to vector<8x128xi32>
      %97 = arith.shrsi %95, %96 : vector<8x128xi32>
      %c15_i32_68 = arith.constant 15 : i32
      %98 = vector.broadcast %c15_i32_68 : i32 to vector<8x128xi32>
      %99 = arith.andi %97, %98 : vector<8x128xi32>
      %100 = arith.sitofp %99 : vector<8x128xi32> to vector<8x128xf32>
      %c1_69 = arith.constant 1 : index
      %c0_70 = arith.constant 0 : index
      %101 = vector.load %arg4[%c1_69, %c0_70] : memref<2x128xf32, #tpu.memory_space<vmem>>, vector<1x128xf32>
      %102 = vector.broadcast %101 : vector<1x128xf32> to vector<8x128xf32>
      %103 = arith.mulf %102, %100 : vector<8x128xf32>
      %c1_71 = arith.constant 1 : index
      %c0_72 = arith.constant 0 : index
      %104 = vector.load %arg5[%c1_71, %c0_72] : memref<2x128xf32, #tpu.memory_space<vmem>>, vector<1x128xf32>
      %105 = vector.broadcast %104 : vector<1x128xf32> to vector<8x128xf32>
      %106 = arith.subf %103, %105 : vector<8x128xf32>
      %107 = arith.truncf %106 : vector<8x128xf32> to vector<8x128xbf16>
      %c40 = arith.constant 40 : index
      %c0_73 = arith.constant 0 : index
      %108 = vector.load %arg8[%c40, %c0_73] : memref<64x128xbf16, #tpu.memory_space<vmem>>, vector<8x128xbf16>
      tpu.vector_store %arg8[%c40, %c0_73], %107 {strides = array<i32>} : memref<64x128xbf16, #tpu.memory_space<vmem>>, vector<8x128xbf16>,
      %c0_74 = arith.constant 0 : index
      %c40_75 = arith.constant 40 : index
      %109 = vector.load %arg2[%c0_74, %c40_75] : memref<16x64xbf16, #tpu.memory_space<vmem>>, vector<16x8xbf16>
      %c40_76 = arith.constant 40 : index
      %c0_77 = arith.constant 0 : index
      %110 = vector.load %arg8[%c40_76, %c0_77] : memref<64x128xbf16, #tpu.memory_space<vmem>>, vector<8x128xbf16>
      %cst_78 = arith.constant dense<0.000000e+00> : vector<16x128xf32>
      %111 = tpu.matmul %109, %110, %cst_78 {dimension_numbers = #tpu.dot_dimension_numbers<[1], [0], [0], [1], [0, 0, 1, 1], [], []>} : vector<16x8xbf16>, vector<8x128xbf16>, vector<16x128xf32> -> vector<16x128xf32>
      %112 = arith.addf %94, %111 : vector<16x128xf32>
      %c0_79 = arith.constant 0 : index
      %c0_80 = arith.constant 0 : index
      %113 = vector.load %arg3[%c0_79, %c0_80] : memref<8x128xi32, #tpu.memory_space<vmem>>, vector<8x128xi32>
      %c24_i32 = arith.constant 24 : i32
      %114 = vector.broadcast %c24_i32 : i32 to vector<8x128xi32>
      %115 = arith.shrsi %113, %114 : vector<8x128xi32>
      %c15_i32_81 = arith.constant 15 : i32
      %116 = vector.broadcast %c15_i32_81 : i32 to vector<8x128xi32>
      %117 = arith.andi %115, %116 : vector<8x128xi32>
      %118 = arith.sitofp %117 : vector<8x128xi32> to vector<8x128xf32>
      %c1_82 = arith.constant 1 : index
      %c0_83 = arith.constant 0 : index
      %119 = vector.load %arg4[%c1_82, %c0_83] : memref<2x128xf32, #tpu.memory_space<vmem>>, vector<1x128xf32>
      %120 = vector.broadcast %119 : vector<1x128xf32> to vector<8x128xf32>
      %121 = arith.mulf %120, %118 : vector<8x128xf32>
      %c1_84 = arith.constant 1 : index
      %c0_85 = arith.constant 0 : index
      %122 = vector.load %arg5[%c1_84, %c0_85] : memref<2x128xf32, #tpu.memory_space<vmem>>, vector<1x128xf32>
      %123 = vector.broadcast %122 : vector<1x128xf32> to vector<8x128xf32>
      %124 = arith.subf %121, %123 : vector<8x128xf32>
      %125 = arith.truncf %124 : vector<8x128xf32> to vector<8x128xbf16>
      %c48 = arith.constant 48 : index
      %c0_86 = arith.constant 0 : index
      %126 = vector.load %arg8[%c48, %c0_86] : memref<64x128xbf16, #tpu.memory_space<vmem>>, vector<8x128xbf16>
      tpu.vector_store %arg8[%c48, %c0_86], %125 {strides = array<i32>} : memref<64x128xbf16, #tpu.memory_space<vmem>>, vector<8x128xbf16>,
      %c0_87 = arith.constant 0 : index
      %c48_88 = arith.constant 48 : index
      %127 = vector.load %arg2[%c0_87, %c48_88] : memref<16x64xbf16, #tpu.memory_space<vmem>>, vector<16x8xbf16>
      %c48_89 = arith.constant 48 : index
      %c0_90 = arith.constant 0 : index
      %128 = vector.load %arg8[%c48_89, %c0_90] : memref<64x128xbf16, #tpu.memory_space<vmem>>, vector<8x128xbf16>
      %cst_91 = arith.constant dense<0.000000e+00> : vector<16x128xf32>
      %129 = tpu.matmul %127, %128, %cst_91 {dimension_numbers = #tpu.dot_dimension_numbers<[1], [0], [0], [1], [0, 0, 1, 1], [], []>} : vector<16x8xbf16>, vector<8x128xbf16>, vector<16x128xf32> -> vector<16x128xf32>
      %130 = arith.addf %112, %129 : vector<16x128xf32>
      %c0_92 = arith.constant 0 : index
      %c0_93 = arith.constant 0 : index
      %131 = vector.load %arg3[%c0_92, %c0_93] : memref<8x128xi32, #tpu.memory_space<vmem>>, vector<8x128xi32>
      %c28_i32 = arith.constant 28 : i32
      %132 = vector.broadcast %c28_i32 : i32 to vector<8x128xi32>
      %133 = arith.shrsi %131, %132 : vector<8x128xi32>
      %c15_i32_94 = arith.constant 15 : i32
      %134 = vector.broadcast %c15_i32_94 : i32 to vector<8x128xi32>
      %135 = arith.andi %133, %134 : vector<8x128xi32>
      %136 = arith.sitofp %135 : vector<8x128xi32> to vector<8x128xf32>
      %c1_95 = arith.constant 1 : index
      %c0_96 = arith.constant 0 : index
      %137 = vector.load %arg4[%c1_95, %c0_96] : memref<2x128xf32, #tpu.memory_space<vmem>>, vector<1x128xf32>
      %138 = vector.broadcast %137 : vector<1x128xf32> to vector<8x128xf32>
      %139 = arith.mulf %138, %136 : vector<8x128xf32>
      %c1_97 = arith.constant 1 : index
      %c0_98 = arith.constant 0 : index
      %140 = vector.load %arg5[%c1_97, %c0_98] : memref<2x128xf32, #tpu.memory_space<vmem>>, vector<1x128xf32>
      %141 = vector.broadcast %140 : vector<1x128xf32> to vector<8x128xf32>
      %142 = arith.subf %139, %141 : vector<8x128xf32>
      %143 = arith.truncf %142 : vector<8x128xf32> to vector<8x128xbf16>
      %c56 = arith.constant 56 : index
      %c0_99 = arith.constant 0 : index
      %144 = vector.load %arg8[%c56, %c0_99] : memref<64x128xbf16, #tpu.memory_space<vmem>>, vector<8x128xbf16>
      tpu.vector_store %arg8[%c56, %c0_99], %143 {strides = array<i32>} : memref<64x128xbf16, #tpu.memory_space<vmem>>, vector<8x128xbf16>,
      %c0_100 = arith.constant 0 : index
      %c56_101 = arith.constant 56 : index
      %145 = vector.load %arg2[%c0_100, %c56_101] : memref<16x64xbf16, #tpu.memory_space<vmem>>, vector<16x8xbf16>
      %c56_102 = arith.constant 56 : index
      %c0_103 = arith.constant 0 : index
      %146 = vector.load %arg8[%c56_102, %c0_103] : memref<64x128xbf16, #tpu.memory_space<vmem>>, vector<8x128xbf16>
      %cst_104 = arith.constant dense<0.000000e+00> : vector<16x128xf32>
      %147 = tpu.matmul %145, %146, %cst_104 {dimension_numbers = #tpu.dot_dimension_numbers<[1], [0], [0], [1], [0, 0, 1, 1], [], []>} : vector<16x8xbf16>, vector<8x128xbf16>, vector<16x128xf32> -> vector<16x128xf32>
      %148 = arith.addf %130, %147 : vector<16x128xf32>
      %c0_105 = arith.constant 0 : index
      %c0_106 = arith.constant 0 : index
      %149 = vector.load %arg6[%c0_105, %c0_106] : memref<1x128xf32, #tpu.memory_space<vmem>>, vector<1x128xf32>
      %150 = vector.broadcast %149 : vector<1x128xf32> to vector<16x128xf32>
      %151 = arith.addf %148, %150 : vector<16x128xf32>
      %c0_107 = arith.constant 0 : index
      %c0_108 = arith.constant 0 : index
      %152 = vector.load %arg7[%c0_107, %c0_108] : memref<16x128xf32, #tpu.memory_space<vmem>>, vector<16x128xf32>
      tpu.vector_store %arg7[%c0_107, %c0_108], %151 {strides = array<i32>} : memref<16x128xf32, #tpu.memory_space<vmem>>, vector<16x128xf32>,
    } else {
    }
    %c0_i32_1 = arith.constant 0 : i32
    %3 = arith.cmpi ne, %arg1, %c0_i32_1 : i32
    %4 = arith.extui %3 : i1 to i32
    %c0_i32_2 = arith.constant 0 : i32
    %5 = arith.cmpi ne, %4, %c0_i32_2 : i32
    scf.if %5 {
      %c0 = arith.constant 0 : index
      %c0_3 = arith.constant 0 : index
      %6 = vector.load %arg2[%c0, %c0_3] : memref<16x64xbf16, #tpu.memory_space<vmem>>, vector<16x64xbf16>
      %c0_4 = arith.constant 0 : index
      %c0_5 = arith.constant 0 : index
      %7 = vector.load %arg8[%c0_4, %c0_5] : memref<64x128xbf16, #tpu.memory_space<vmem>>, vector<64x128xbf16>
      %cst = arith.constant dense<0.000000e+00> : vector<16x128xf32>
      %8 = tpu.matmul %6, %7, %cst {dimension_numbers = #tpu.dot_dimension_numbers<[1], [0], [0], [1], [0, 0, 1, 1], [], []>} : vector<16x64xbf16>, vector<64x128xbf16>, vector<16x128xf32> -> vector<16x128xf32>
      %c0_6 = arith.constant 0 : index
      %c0_7 = arith.constant 0 : index
      %9 = vector.load %arg6[%c0_6, %c0_7] : memref<1x128xf32, #tpu.memory_space<vmem>>, vector<1x128xf32>
      %10 = vector.broadcast %9 : vector<1x128xf32> to vector<16x128xf32>
      %11 = arith.addf %8, %10 : vector<16x128xf32>
      %c0_8 = arith.constant 0 : index
      %c0_9 = arith.constant 0 : index
      %12 = vector.load %arg7[%c0_8, %c0_9] : memref<16x128xf32, #tpu.memory_space<vmem>>, vector<16x128xf32>
      tpu.vector_store %arg7[%c0_8, %c0_9], %11 {strides = array<i32>} : memref<16x128xf32, #tpu.memory_space<vmem>>, vector<16x128xf32>,
    } else {
    }
    return
  }
  func.func @transform_0(%arg0: i32, %arg1: i32) -> (i32, i32) {
    %c0_i32 = arith.constant 0 : i32
    %c0_i32_0 = arith.constant 0 : i32
    return %arg1, %c0_i32 : i32, i32
  }
  func.func @transform_1(%arg0: i32, %arg1: i32) -> (i32, i32) {
    %c0_i32 = arith.constant 0 : i32
    %c0_i32_0 = arith.constant 0 : i32
    return %c0_i32, %arg0 : i32, i32
  }
  func.func @transform_2(%arg0: i32, %arg1: i32) -> (i32, i32) {
    %c0_i32 = arith.constant 0 : i32
    %c0_i32_0 = arith.constant 0 : i32
    return %c0_i32, %arg0 : i32, i32
  }
  func.func @transform_3(%arg0: i32, %arg1: i32) -> (i32, i32) {
    %c0_i32 = arith.constant 0 : i32
    %c0_i32_0 = arith.constant 0 : i32
    return %c0_i32, %arg0 : i32, i32
  }
  func.func @transform_4(%arg0: i32, %arg1: i32) -> (i32, i32) {
    %c0_i32 = arith.constant 0 : i32
    %c0_i32_0 = arith.constant 0 : i32
    return %c0_i32, %arg0 : i32, i32
  }
  func.func @transform_5(%arg0: i32, %arg1: i32) -> (i32, i32) {
    %c0_i32 = arith.constant 0 : i32
    return %arg1, %arg0 : i32, i32
  }
}

</mosaic_0001>

<llo_original>
// kernel: tpu_custom_call.1
$region0: #{tpu_custom_call.1}
  #allocation0 [shape = 'u32[]', space=smem, size = 0x4, offset = 0x4, fixed_abs, tag = 'smem constant byte address 0x4 - core index']
  #allocation1 [shape = 'u32[144,128]{1,0:T(1,128)}', space=vmem, size = 0x12000, scoped, tag = 'internal scratch']
  #allocation2 [shape = 'bf16[64,128]{1,0:T(16,128)(2,1)}', space=vmem, size = 0x4000, scoped, tag = 'scratch operand']
  %s0 = inlined_call_operand.hbm [shape: bf16[16,64], index: 0, kind: input, shape index: {}]
  %s1 = inlined_call_operand.hbm [shape: s32[8,128], index: 1, kind: input, shape index: {}]
  %s2 = inlined_call_operand.vmem [shape: f32[2,128], index: 2, kind: input, shape index: {}]
  %s3 = inlined_call_operand.vmem [shape: f32[2,128], index: 3, kind: input, shape index: {}]
  %s4 = inlined_call_operand.vmem [shape: f32[1,128], index: 4, kind: input, shape index: {}]
  %s5 = inlined_call_operand.hbm [shape: f32[16,128], index: 5, kind: output, shape index: {}]
  %s6 = sld [smem:[#allocation0]]
  $region46: #{tpu_custom_call.1} parent=0
    _
  %s8 = ssub.s32 1, %s6
  %s9 = scalar_select 0, %s8, %s6
  $region1: #{tpu_custom_call.1} parent=0
    #allocation3 [shape = 'u8[4096]{0}', space=vmem, size = 0x1000, scoped, tag = 'input window, operand 0, single buffered']
    #allocation4 [shape = 's32[1]{0}', space=sflag, size = 0x4, scoped, tag = 'scoped memory for tpu_custom_call.1']
    #allocation5 [shape = 's32[1]{0}', space=sflag, size = 0x4, scoped, tag = 'scoped memory for tpu_custom_call.1']
    #allocation6 [shape = 'u8[4096]{0}', space=vmem, size = 0x1000, scoped, tag = 'input window, operand 1, single buffered']
    #allocation7 [shape = 's32[1]{0}', space=sflag, size = 0x4, scoped, tag = 'scoped memory for tpu_custom_call.1']
    #allocation8 [shape = 'u8[8192]{0}', space=vmem, size = 0x2000, scoped, tag = 'output window, operand 0, single buffered']
    %10 = vsyncpa [#allocation4], 0
    %11 = vsyncpa [#allocation7], 0
    %12 = vsyncpa [#allocation5], 0
    // Predicated region
    $region2: #{tpu_custom_call.1} parent=1 // pred_check
      _
    $region3: #{tpu_custom_call.1} parent=1 // pred_check_branch
      %14 = sbr.rel (0) target = $region5
    $region4: #{tpu_custom_call.1} parent=1 // pred_region
      %s16 = ssub.s32 128, 128
      %17 = vsyncadd [#allocation4], %s16
      %s18 = sshll.u32 [#allocation3], 4
      %s19 = int_to_ptr.vmem [resolvable:$true] %s18
      %24 = dma.hbm_to_vmem [thread:$0]  %s0, 128, %s19, [#allocation4], 64, 64, 4
    $region5: #{tpu_custom_call.1} parent=1 // pred_fallthru
      _
    // Predicated region
    $region6: #{tpu_custom_call.1} parent=1 // pred_check
      _
    $region7: #{tpu_custom_call.1} parent=1 // pred_check_branch
      %26 = sbr.rel (0) target = $region9
    $region8: #{tpu_custom_call.1} parent=1 // pred_region
      %s28 = ssub.s32 128, 128
      %29 = vsyncadd [#allocation7], %s28
      %s31 = sshll.u32 [#allocation6], 4
      %s32 = int_to_ptr.vmem [resolvable:$true] %s31
      %34 = dma.hbm_to_vmem [thread:$0]  %s1, 128, %s32, [#allocation7]
    $region9: #{tpu_custom_call.1} parent=1 // pred_fallthru
      _
    // Predicated region
    $region10: #{tpu_custom_call.1} parent=1 // pred_check
      _
    $region11: #{tpu_custom_call.1} parent=1 // pred_check_branch
      %36 = sbr.rel (0) target = $region13
    $region12: #{tpu_custom_call.1} parent=1 // pred_region
      _
    $region13: #{tpu_custom_call.1} parent=1 // pred_fallthru
      _
    // Predicated region
    $region14: #{tpu_custom_call.1} parent=1 // pred_check
      _
    $region15: #{tpu_custom_call.1} parent=1 // pred_check_branch
      %38 = sbr.rel (0) target = $region17
    $region16: #{tpu_custom_call.1} parent=1 // pred_region
      _
    $region17: #{tpu_custom_call.1} parent=1 // pred_fallthru
      _
    // Predicated region
    $region18: #{tpu_custom_call.1} parent=1 // pred_check
      _
    $region19: #{tpu_custom_call.1} parent=1 // pred_check_branch
      %40 = sbr.rel (0) target = $region21
    $region20: #{tpu_custom_call.1} parent=1 // pred_region
      _
    $region21: #{tpu_custom_call.1} parent=1 // pred_fallthru
      _
    // Predicated region
    $region22: #{tpu_custom_call.1} parent=1 // pred_check
      _
    $region23: #{tpu_custom_call.1} parent=1 // pred_check_branch
      %42 = sbr.rel (0) target = $region25
    $region24: #{tpu_custom_call.1} parent=1 // pred_region
      %43 = dma.done [#allocation4], 128
    $region25: #{tpu_custom_call.1} parent=1 // pred_fallthru
      _
    // Predicated region
    $region26: #{tpu_custom_call.1} parent=1 // pred_check
      _
    $region27: #{tpu_custom_call.1} parent=1 // pred_check_branch
      %45 = sbr.rel (0) target = $region29
    $region28: #{tpu_custom_call.1} parent=1 // pred_region
      %46 = dma.done [#allocation7], 128
    $region29: #{tpu_custom_call.1} parent=1 // pred_fallthru
      _
    %p48 = scmp.eq.s32.totalorder 0, 0
    // Predicated region
    $region30: #{tpu_custom_call.1} parent=1 // pred_check
      %p49 = pneg %p48
    $region31: #{tpu_custom_call.1} parent=1 // pred_check_branch
      %51 = sbr.rel (%p49) target = $region33
    $region32: #{tpu_custom_call.1} parent=1 // pred_region
      %v52 = vld [vmem:[#allocation6] sm:$0xff]
      %v53 = vand.u32 %v52, 15
      %v54 = vcvt.s32.f32 %v53
      %v55 = vld [vmem:[%s2] sm:$0x1]
      %v56 = vlaneseq
      %v57 = vshrl.u32 %v56, 7
      %v58 = vsub.s32 0, %v57
      %v59 = vrot.slane %v55, %v58
      %v60 = vmul.f32 %v59, %v54
      %v61 = vld [vmem:[%s3] sm:$0x1]
      %v62 = vlaneseq
      %v63 = vshrl.u32 %v62, 7
      %v64 = vsub.s32 0, %v63
      %v65 = vrot.slane %v61, %v64
      %v66 = vsub.f32 %v60, %v65
      %v67 = vpack.c.bf16 %v66, %v66
      %68 = vst [vmem:[#allocation2] sm:$0xf] %v67
      %v69 = vld [vmem:[#allocation3] sm:$0xf]
      %v70 = vld [vmem:[#allocation3 + $0x4] sm:$0xf]
      %v71 = vld [vmem:[#allocation2] sm:$0xf]
      %v72 = vld [vmem:[#allocation6] sm:$0xff]
      %v73 = vshra.s32 %v72, 4
      %v74 = vand.u32 %v73, 15
      %v75 = vcvt.s32.f32 %v74
      %v76 = vld [vmem:[%s2] sm:$0x1]
      %v77 = vlaneseq
      %v78 = vshrl.u32 %v77, 7
      %v79 = vsub.s32 0, %v78
      %v80 = vrot.slane %v76, %v79
      %v81 = vmul.f32 %v80, %v75
      %v82 = vld [vmem:[%s3] sm:$0x1]
      %v83 = vlaneseq
      %v84 = vshrl.u32 %v83, 7
      %v85 = vsub.s32 0, %v84
      %v86 = vrot.slane %v82, %v85
      %v87 = vsub.f32 %v81, %v86
      %v88 = vpack.c.bf16 %v87, %v87
      %v90 = vrot.slane %v88, 4
      %92 = vst [vmem:[#allocation2] sm:$0xf0] %v90
      %v93 = vld [vmem:[#allocation3] sm:$0xf]
      %v94 = vld [vmem:[#allocation3 + $0x4] sm:$0xf]
      %v95 = vld [vmem:[#allocation2] sm:$0xf0]
      %v98 = vunpack.c.l.b16 %v93
      %v99 = vunpack.c.l.b16 %v94
      %v100 = vpack.c.b16 %v99, %v98
      %101 = vrot.lane.b32.xlu0 %v100, 120
      %v102 = vpop.permute.xlu0 %101
      %v104 = vrot.slane %v95, 4
      %vm105 = vcmask 64512
      %v107 = vsel %vm105, %v102, 0
      %vm109 = vcmask 1043456
      %v111 = vsel %vm109, %v104, 0
      %113 = vmatprep.subr.bf16.mxu0 0
      %114 = vmatpush1.bf16.msra.mxu0 %v111
      %115 = vmatprep.subr.bf16.mxu0 0
      %116 = vmatpush1.bf16.msra.mxu0 0
      %117 = vmatprep.subr.bf16.mxu0 0
      %118 = vmatpush1.bf16.msra.mxu0 0
      %119 = vmatprep.subr.bf16.mxu0 0
      %120 = vmatpush1.bf16.msra.mxu0 0
      %121 = vmatprep.subr.bf16.mxu0 0
      %122 = vmatpush1.bf16.msra.mxu0 0
      %123 = vmatprep.subr.bf16.mxu0 0
      %124 = vmatpush1.bf16.msra.mxu0 0
      %125 = vmatprep.subr.bf16.mxu0 0
      %126 = vmatpush1.bf16.msra.mxu0 0
      %127 = vmatprep.subr.bf16.mxu0 0
      %128 = vmatpush1.bf16.msra.mxu0 0
      %129 = vmatprep.subr.bf16.mxu0 0
      %130 = vmatpush1.bf16.msra.mxu0 0
      %131 = vmatprep.subr.bf16.mxu0 0
      %132 = vmatpush1.bf16.msra.mxu0 0
      %133 = vmatprep.subr.bf16.mxu0 0
      %134 = vmatpush1.bf16.msra.mxu0 0
      %135 = vmatprep.subr.bf16.mxu0 0
      %136 = vmatpush1.bf16.msra.mxu0 0
      %137 = vmatprep.subr.bf16.mxu0 0
      %138 = vmatpush1.bf16.msra.mxu0 0
      %139 = vmatprep.subr.bf16.mxu0 0
      %140 = vmatpush1.bf16.msra.mxu0 0
      %141 = vmatprep.subr.bf16.mxu0 0
      %142 = vmatpush1.bf16.msra.mxu0 0
      %143 = vmatprep.subr.bf16.mxu0 0
      %144 = vmatpush1.bf16.msra.mxu0 0
      %145 = vmatprep.mubr.bf16.mxu0 0
      %146 = vmatmul.mubr.bf16.gmra.mrb[0].mxu0 %v107
      %v147 = vpop.f32.mrb[0].mxu0
      %v148 = vadd.f32 0.0, %v147
      %v149 = vpop.f32.mrb[0].mxu0
      %v150 = vpop.f32.mrb[0].mxu0
      %v151 = vadd.f32 0.0, %v150
      %v152 = vpop.f32.mrb[0].mxu0
      %153 = vdwg.mxu0
      %v156 = vunpack.c.l.b16 %v69
      %v157 = vunpack.c.l.b16 %v70
      %v158 = vpack.c.b16 %v157, %v156
      %v160 = vsel %vm105, %v158, 0
      %v163 = vsel %vm109, %v71, 0
      %165 = vmatprep.subr.bf16.mxu0 0
      %166 = vmatpush1.bf16.msra.mxu0 %v163
      %167 = vmatprep.subr.bf16.mxu0 0
      %168 = vmatpush1.bf16.msra.mxu0 0
      %169 = vmatprep.subr.bf16.mxu0 0
      %170 = vmatpush1.bf16.msra.mxu0 0
      %171 = vmatprep.subr.bf16.mxu0 0
      %172 = vmatpush1.bf16.msra.mxu0 0
      %173 = vmatprep.subr.bf16.mxu0 0
      %174 = vmatpush1.bf16.msra.mxu0 0
      %175 = vmatprep.subr.bf16.mxu0 0
      %176 = vmatpush1.bf16.msra.mxu0 0
      %177 = vmatprep.subr.bf16.mxu0 0
      %178 = vmatpush1.bf16.msra.mxu0 0
      %179 = vmatprep.subr.bf16.mxu0 0
      %180 = vmatpush1.bf16.msra.mxu0 0
      %181 = vmatprep.subr.bf16.mxu0 0
      %182 = vmatpush1.bf16.msra.mxu0 0
      %183 = vmatprep.subr.bf16.mxu0 0
      %184 = vmatpush1.bf16.msra.mxu0 0
      %185 = vmatprep.subr.bf16.mxu0 0
      %186 = vmatpush1.bf16.msra.mxu0 0
      %187 = vmatprep.subr.bf16.mxu0 0
      %188 = vmatpush1.bf16.msra.mxu0 0
      %189 = vmatprep.subr.bf16.mxu0 0
      %190 = vmatpush1.bf16.msra.mxu0 0
      %191 = vmatprep.subr.bf16.mxu0 0
      %192 = vmatpush1.bf16.msra.mxu0 0
      %193 = vmatprep.subr.bf16.mxu0 0
      %194 = vmatpush1.bf16.msra.mxu0 0
      %195 = vmatprep.subr.bf16.mxu0 0
      %196 = vmatpush1.bf16.msra.mxu0 0
      %197 = vmatprep.mubr.bf16.mxu0 0
      %198 = vmatmul.mubr.bf16.gmra.mrb[0].mxu0 %v160
      %v199 = vpop.f32.mrb[0].mxu0
      %v200 = vadd.f32 %v148, %v199
      %v201 = vpop.f32.mrb[0].mxu0
      %v202 = vpop.f32.mrb[0].mxu0
      %v203 = vadd.f32 %v151, %v202
      %v204 = vpop.f32.mrb[0].mxu0
      %205 = vdwg.mxu0
      %v206 = vld [vmem:[#allocation6] sm:$0xff]
      %v207 = vshra.s32 %v206, 8
      %v208 = vand.u32 %v207, 15
      %v209 = vcvt.s32.f32 %v208
      %v210 = vld [vmem:[%s2] sm:$0x1]
      %v211 = vlaneseq
      %v212 = vshrl.u32 %v211, 7
      %v213 = vsub.s32 0, %v212
      %v214 = vrot.slane %v210, %v213
      %v215 = vmul.f32 %v214, %v209
      %v216 = vld [vmem:[%s3] sm:$0x1]
      %v217 = vlaneseq
      %v218 = vshrl.u32 %v217, 7
      %v219 = vsub.s32 0, %v218
      %v220 = vrot.slane %v216, %v219
      %v221 = vsub.f32 %v215, %v220
      %v222 = vpack.c.bf16 %v221, %v221
      %223 = vst [vmem:[#allocation2 + $0x8] sm:$0xf] %v222
      %v224 = vld [vmem:[#allocation3] sm:$0xf]
      %v225 = vld [vmem:[#allocation3 + $0x4] sm:$0xf]
      %v226 = vld [vmem:[#allocation2 + $0x8] sm:$0xf]
      %v229 = vunpack.c.l.b16 %v224
      %v230 = vunpack.c.l.b16 %v225
      %v231 = vpack.c.b16 %v230, %v229
      %232 = vrot.lane.b32.xlu0 %v231, 112
      %v233 = vpop.permute.xlu0 %232
      %v235 = vsel %vm105, %v233, 0
      %v238 = vsel %vm109, %v226, 0
      %240 = vmatprep.subr.bf16.mxu0 0
      %241 = vmatpush1.bf16.msra.mxu0 %v238
      %242 = vmatprep.subr.bf16.mxu0 0
      %243 = vmatpush1.bf16.msra.mxu0 0
      %244 = vmatprep.subr.bf16.mxu0 0
      %245 = vmatpush1.bf16.msra.mxu0 0
      %246 = vmatprep.subr.bf16.mxu0 0
      %247 = vmatpush1.bf16.msra.mxu0 0
      %248 = vmatprep.subr.bf16.mxu0 0
      %249 = vmatpush1.bf16.msra.mxu0 0
      %250 = vmatprep.subr.bf16.mxu0 0
      %251 = vmatpush1.bf16.msra.mxu0 0
      %252 = vmatprep.subr.bf16.mxu0 0
      %253 = vmatpush1.bf16.msra.mxu0 0
      %254 = vmatprep.subr.bf16.mxu0 0
      %255 = vmatpush1.bf16.msra.mxu0 0
      %256 = vmatprep.subr.bf16.mxu0 0
      %257 = vmatpush1.bf16.msra.mxu0 0
      %258 = vmatprep.subr.bf16.mxu0 0
      %259 = vmatpush1.bf16.msra.mxu0 0
      %260 = vmatprep.subr.bf16.mxu0 0
      %261 = vmatpush1.bf16.msra.mxu0 0
      %262 = vmatprep.subr.bf16.mxu0 0
      %263 = vmatpush1.bf16.msra.mxu0 0
      %264 = vmatprep.subr.bf16.mxu0 0
      %265 = vmatpush1.bf16.msra.mxu0 0
      %266 = vmatprep.subr.bf16.mxu0 0
      %267 = vmatpush1.bf16.msra.mxu0 0
      %268 = vmatprep.subr.bf16.mxu0 0
      %269 = vmatpush1.bf16.msra.mxu0 0
      %270 = vmatprep.subr.bf16.mxu0 0
      %271 = vmatpush1.bf16.msra.mxu0 0
      %272 = vmatprep.mubr.bf16.mxu0 0
      %273 = vmatmul.mubr.bf16.gmra.mrb[0].mxu0 %v235
      %v274 = vpop.f32.mrb[0].mxu0
      %v275 = vadd.f32 0.0, %v274
      %v276 = vpop.f32.mrb[0].mxu0
      %v277 = vpop.f32.mrb[0].mxu0
      %v278 = vadd.f32 0.0, %v277
      %v279 = vpop.f32.mrb[0].mxu0
      %280 = vdwg.mxu0
      %v281 = vadd.f32 %v200, %v275
      %v282 = vadd.f32 %v203, %v278
      %v283 = vld [vmem:[#allocation6] sm:$0xff]
      %v284 = vshra.s32 %v283, 12
      %v285 = vand.u32 %v284, 15
      %v286 = vcvt.s32.f32 %v285
      %v287 = vld [vmem:[%s2] sm:$0x1]
      %v288 = vlaneseq
      %v289 = vshrl.u32 %v288, 7
      %v290 = vsub.s32 0, %v289
      %v291 = vrot.slane %v287, %v290
      %v292 = vmul.f32 %v291, %v286
      %v293 = vld [vmem:[%s3] sm:$0x1]
      %v294 = vlaneseq
      %v295 = vshrl.u32 %v294, 7
      %v296 = vsub.s32 0, %v295
      %v297 = vrot.slane %v293, %v296
      %v298 = vsub.f32 %v292, %v297
      %v299 = vpack.c.bf16 %v298, %v298
      %v301 = vrot.slane %v299, 4
      %303 = vst [vmem:[#allocation2 + $0x8] sm:$0xf0] %v301
      %v304 = vld [vmem:[#allocation3] sm:$0xf]
      %v305 = vld [vmem:[#allocation3 + $0x4] sm:$0xf]
      %v306 = vld [vmem:[#allocation2 + $0x8] sm:$0xf0]
      %v309 = vunpack.c.l.b16 %v304
      %v310 = vunpack.c.l.b16 %v305
      %v311 = vpack.c.b16 %v310, %v309
      %312 = vrot.lane.b32.xlu0 %v311, 104
      %v313 = vpop.permute.xlu0 %312
      %v315 = vrot.slane %v306, 4
      %v317 = vsel %vm105, %v313, 0
      %v320 = vsel %vm109, %v315, 0
      %322 = vmatprep.subr.bf16.mxu0 0
      %323 = vmatpush1.bf16.msra.mxu0 %v320
      %324 = vmatprep.subr.bf16.mxu0 0
      %325 = vmatpush1.bf16.msra.mxu0 0
      %326 = vmatprep.subr.bf16.mxu0 0
      %327 = vmatpush1.bf16.msra.mxu0 0
      %328 = vmatprep.subr.bf16.mxu0 0
      %329 = vmatpush1.bf16.msra.mxu0 0
      %330 = vmatprep.subr.bf16.mxu0 0
      %331 = vmatpush1.bf16.msra.mxu0 0
      %332 = vmatprep.subr.bf16.mxu0 0
      %333 = vmatpush1.bf16.msra.mxu0 0
      %334 = vmatprep.subr.bf16.mxu0 0
      %335 = vmatpush1.bf16.msra.mxu0 0
      %336 = vmatprep.subr.bf16.mxu0 0
      %337 = vmatpush1.bf16.msra.mxu0 0
      %338 = vmatprep.subr.bf16.mxu0 0
      %339 = vmatpush1.bf16.msra.mxu0 0
      %340 = vmatprep.subr.bf16.mxu0 0
      %341 = vmatpush1.bf16.msra.mxu0 0
      %342 = vmatprep.subr.bf16.mxu0 0
      %343 = vmatpush1.bf16.msra.mxu0 0
      %344 = vmatprep.subr.bf16.mxu0 0
      %345 = vmatpush1.bf16.msra.mxu0 0
      %346 = vmatprep.subr.bf16.mxu0 0
      %347 = vmatpush1.bf16.msra.mxu0 0
      %348 = vmatprep.subr.bf16.mxu0 0
      %349 = vmatpush1.bf16.msra.mxu0 0
      %350 = vmatprep.subr.bf16.mxu0 0
      %351 = vmatpush1.bf16.msra.mxu0 0
      %352 = vmatprep.subr.bf16.mxu0 0
      %353 = vmatpush1.bf16.msra.mxu0 0
      %354 = vmatprep.mubr.bf16.mxu0 0
      %355 = vmatmul.mubr.bf16.gmra.mrb[0].mxu0 %v317
      %v356 = vpop.f32.mrb[0].mxu0
      %v357 = vadd.f32 0.0, %v356
      %v358 = vpop.f32.mrb[0].mxu0
      %v359 = vpop.f32.mrb[0].mxu0
      %v360 = vadd.f32 0.0, %v359
      %v361 = vpop.f32.mrb[0].mxu0
      %362 = vdwg.mxu0
      %v363 = vadd.f32 %v281, %v357
      %v364 = vadd.f32 %v282, %v360
      %v365 = vld [vmem:[#allocation6] sm:$0xff]
      %v366 = vshra.s32 %v365, 16
      %v367 = vand.u32 %v366, 15
      %v368 = vcvt.s32.f32 %v367
      %v369 = vld [vmem:[%s2 + $0x1] sm:$0x1]
      %v370 = vlaneseq
      %v371 = vshrl.u32 %v370, 7
      %v372 = vsub.s32 0, %v371
      %v373 = vrot.slane %v369, %v372
      %v374 = vmul.f32 %v373, %v368
      %v375 = vld [vmem:[%s3 + $0x1] sm:$0x1]
      %v376 = vlaneseq
      %v377 = vshrl.u32 %v376, 7
      %v378 = vsub.s32 0, %v377
      %v379 = vrot.slane %v375, %v378
      %v380 = vsub.f32 %v374, %v379
      %v381 = vpack.c.bf16 %v380, %v380
      %382 = vst [vmem:[#allocation2 + $0x10] sm:$0xf] %v381
      %v383 = vld [vmem:[#allocation3] sm:$0xf]
      %v384 = vld [vmem:[#allocation3 + $0x4] sm:$0xf]
      %v385 = vld [vmem:[#allocation2 + $0x10] sm:$0xf]
      %v388 = vunpack.c.l.b16 %v383
      %v389 = vunpack.c.l.b16 %v384
      %v390 = vpack.c.b16 %v389, %v388
      %391 = vrot.lane.b32.xlu0 %v390, 96
      %v392 = vpop.permute.xlu0 %391
      %v394 = vsel %vm105, %v392, 0
      %v397 = vsel %vm109, %v385, 0
      %399 = vmatprep.subr.bf16.mxu0 0
      %400 = vmatpush1.bf16.msra.mxu0 %v397
      %401 = vmatprep.subr.bf16.mxu0 0
      %402 = vmatpush1.bf16.msra.mxu0 0
      %403 = vmatprep.subr.bf16.mxu0 0
      %404 = vmatpush1.bf16.msra.mxu0 0
      %405 = vmatprep.subr.bf16.mxu0 0
      %406 = vmatpush1.bf16.msra.mxu0 0
      %407 = vmatprep.subr.bf16.mxu0 0
      %408 = vmatpush1.bf16.msra.mxu0 0
      %409 = vmatprep.subr.bf16.mxu0 0
      %410 = vmatpush1.bf16.msra.mxu0 0
      %411 = vmatprep.subr.bf16.mxu0 0
      %412 = vmatpush1.bf16.msra.mxu0 0
      %413 = vmatprep.subr.bf16.mxu0 0
      %414 = vmatpush1.bf16.msra.mxu0 0
      %415 = vmatprep.subr.bf16.mxu0 0
      %416 = vmatpush1.bf16.msra.mxu0 0
      %417 = vmatprep.subr.bf16.mxu0 0
      %418 = vmatpush1.bf16.msra.mxu0 0
      %419 = vmatprep.subr.bf16.mxu0 0
      %420 = vmatpush1.bf16.msra.mxu0 0
      %421 = vmatprep.subr.bf16.mxu0 0
      %422 = vmatpush1.bf16.msra.mxu0 0
      %423 = vmatprep.subr.bf16.mxu0 0
      %424 = vmatpush1.bf16.msra.mxu0 0
      %425 = vmatprep.subr.bf16.mxu0 0
      %426 = vmatpush1.bf16.msra.mxu0 0
      %427 = vmatprep.subr.bf16.mxu0 0
      %428 = vmatpush1.bf16.msra.mxu0 0
      %429 = vmatprep.subr.bf16.mxu0 0
      %430 = vmatpush1.bf16.msra.mxu0 0
      %431 = vmatprep.mubr.bf16.mxu0 0
      %432 = vmatmul.mubr.bf16.gmra.mrb[0].mxu0 %v394
      %v433 = vpop.f32.mrb[0].mxu0
      %v434 = vadd.f32 0.0, %v433
      %v435 = vpop.f32.mrb[0].mxu0
      %v436 = vpop.f32.mrb[0].mxu0
      %v437 = vadd.f32 0.0, %v436
      %v438 = vpop.f32.mrb[0].mxu0
      %439 = vdwg.mxu0
      %v440 = vadd.f32 %v363, %v434
      %v441 = vadd.f32 %v364, %v437
      %v442 = vld [vmem:[#allocation6] sm:$0xff]
      %v443 = vshra.s32 %v442, 20
      %v444 = vand.u32 %v443, 15
      %v445 = vcvt.s32.f32 %v444
      %v446 = vld [vmem:[%s2 + $0x1] sm:$0x1]
      %v447 = vlaneseq
      %v448 = vshrl.u32 %v447, 7
      %v449 = vsub.s32 0, %v448
      %v450 = vrot.slane %v446, %v449
      %v451 = vmul.f32 %v450, %v445
      %v452 = vld [vmem:[%s3 + $0x1] sm:$0x1]
      %v453 = vlaneseq
      %v454 = vshrl.u32 %v453, 7
      %v455 = vsub.s32 0, %v454
      %v456 = vrot.slane %v452, %v455
      %v457 = vsub.f32 %v451, %v456
      %v458 = vpack.c.bf16 %v457, %v457
      %v460 = vrot.slane %v458, 4
      %462 = vst [vmem:[#allocation2 + $0x10] sm:$0xf0] %v460
      %v463 = vld [vmem:[#allocation3] sm:$0xf]
      %v464 = vld [vmem:[#allocation3 + $0x4] sm:$0xf]
      %v465 = vld [vmem:[#allocation2 + $0x10] sm:$0xf0]
      %v468 = vunpack.c.l.b16 %v463
      %v469 = vunpack.c.l.b16 %v464
      %v470 = vpack.c.b16 %v469, %v468
      %471 = vrot.lane.b32.xlu0 %v470, 88
      %v472 = vpop.permute.xlu0 %471
      %v474 = vrot.slane %v465, 4
      %v476 = vsel %vm105, %v472, 0
      %v479 = vsel %vm109, %v474, 0
      %481 = vmatprep.subr.bf16.mxu0 0
      %482 = vmatpush1.bf16.msra.mxu0 %v479
      %483 = vmatprep.subr.bf16.mxu0 0
      %484 = vmatpush1.bf16.msra.mxu0 0
      %485 = vmatprep.subr.bf16.mxu0 0
      %486 = vmatpush1.bf16.msra.mxu0 0
      %487 = vmatprep.subr.bf16.mxu0 0
      %488 = vmatpush1.bf16.msra.mxu0 0
      %489 = vmatprep.subr.bf16.mxu0 0
      %490 = vmatpush1.bf16.msra.mxu0 0
      %491 = vmatprep.subr.bf16.mxu0 0
      %492 = vmatpush1.bf16.msra.mxu0 0
      %493 = vmatprep.subr.bf16.mxu0 0
      %494 = vmatpush1.bf16.msra.mxu0 0
      %495 = vmatprep.subr.bf16.mxu0 0
      %496 = vmatpush1.bf16.msra.mxu0 0
      %497 = vmatprep.subr.bf16.mxu0 0
      %498 = vmatpush1.bf16.msra.mxu0 0
      %499 = vmatprep.subr.bf16.mxu0 0
      %500 = vmatpush1.bf16.msra.mxu0 0
      %501 = vmatprep.subr.bf16.mxu0 0
      %502 = vmatpush1.bf16.msra.mxu0 0
      %503 = vmatprep.subr.bf16.mxu0 0
      %504 = vmatpush1.bf16.msra.mxu0 0
      %505 = vmatprep.subr.bf16.mxu0 0
      %506 = vmatpush1.bf16.msra.mxu0 0
      %507 = vmatprep.subr.bf16.mxu0 0
      %508 = vmatpush1.bf16.msra.mxu0 0
      %509 = vmatprep.subr.bf16.mxu0 0
      %510 = vmatpush1.bf16.msra.mxu0 0
      %511 = vmatprep.subr.bf16.mxu0 0
      %512 = vmatpush1.bf16.msra.mxu0 0
      %513 = vmatprep.mubr.bf16.mxu0 0
      %514 = vmatmul.mubr.bf16.gmra.mrb[0].mxu0 %v476
      %v515 = vpop.f32.mrb[0].mxu0
      %v516 = vadd.f32 0.0, %v515
      %v517 = vpop.f32.mrb[0].mxu0
      %v518 = vpop.f32.mrb[0].mxu0
      %v519 = vadd.f32 0.0, %v518
      %v520 = vpop.f32.mrb[0].mxu0
      %521 = vdwg.mxu0
      %v522 = vadd.f32 %v440, %v516
      %v523 = vadd.f32 %v441, %v519
      %v524 = vld [vmem:[#allocation6] sm:$0xff]
      %v525 = vshra.s32 %v524, 24
      %v526 = vand.u32 %v525, 15
      %v527 = vcvt.s32.f32 %v526
      %v528 = vld [vmem:[%s2 + $0x1] sm:$0x1]
      %v529 = vlaneseq
      %v530 = vshrl.u32 %v529, 7
      %v531 = vsub.s32 0, %v530
      %v532 = vrot.slane %v528, %v531
      %v533 = vmul.f32 %v532, %v527
      %v534 = vld [vmem:[%s3 + $0x1] sm:$0x1]
      %v535 = vlaneseq
      %v536 = vshrl.u32 %v535, 7
      %v537 = vsub.s32 0, %v536
      %v538 = vrot.slane %v534, %v537
      %v539 = vsub.f32 %v533, %v538
      %v540 = vpack.c.bf16 %v539, %v539
      %541 = vst [vmem:[#allocation2 + $0x18] sm:$0xf] %v540
      %v542 = vld [vmem:[#allocation3] sm:$0xf]
      %v543 = vld [vmem:[#allocation3 + $0x4] sm:$0xf]
      %v544 = vld [vmem:[#allocation2 + $0x18] sm:$0xf]
      %v547 = vunpack.c.l.b16 %v542
      %v548 = vunpack.c.l.b16 %v543
      %v549 = vpack.c.b16 %v548, %v547
      %550 = vrot.lane.b32.xlu0 %v549, 80
      %v551 = vpop.permute.xlu0 %550
      %v553 = vsel %vm105, %v551, 0
      %v556 = vsel %vm109, %v544, 0
      %558 = vmatprep.subr.bf16.mxu0 0
      %559 = vmatpush1.bf16.msra.mxu0 %v556
      %560 = vmatprep.subr.bf16.mxu0 0
      %561 = vmatpush1.bf16.msra.mxu0 0
      %562 = vmatprep.subr.bf16.mxu0 0
      %563 = vmatpush1.bf16.msra.mxu0 0
      %564 = vmatprep.subr.bf16.mxu0 0
      %565 = vmatpush1.bf16.msra.mxu0 0
      %566 = vmatprep.subr.bf16.mxu0 0
      %567 = vmatpush1.bf16.msra.mxu0 0
      %568 = vmatprep.subr.bf16.mxu0 0
      %569 = vmatpush1.bf16.msra.mxu0 0
      %570 = vmatprep.subr.bf16.mxu0 0
      %571 = vmatpush1.bf16.msra.mxu0 0
      %572 = vmatprep.subr.bf16.mxu0 0
      %573 = vmatpush1.bf16.msra.mxu0 0
      %574 = vmatprep.subr.bf16.mxu0 0
      %575 = vmatpush1.bf16.msra.mxu0 0
      %576 = vmatprep.subr.bf16.mxu0 0
      %577 = vmatpush1.bf16.msra.mxu0 0
      %578 = vmatprep.subr.bf16.mxu0 0
      %579 = vmatpush1.bf16.msra.mxu0 0
      %580 = vmatprep.subr.bf16.mxu0 0
      %581 = vmatpush1.bf16.msra.mxu0 0
      %582 = vmatprep.subr.bf16.mxu0 0
      %583 = vmatpush1.bf16.msra.mxu0 0
      %584 = vmatprep.subr.bf16.mxu0 0
      %585 = vmatpush1.bf16.msra.mxu0 0
      %586 = vmatprep.subr.bf16.mxu0 0
      %587 = vmatpush1.bf16.msra.mxu0 0
      %588 = vmatprep.subr.bf16.mxu0 0
      %589 = vmatpush1.bf16.msra.mxu0 0
      %590 = vmatprep.mubr.bf16.mxu0 0
      %591 = vmatmul.mubr.bf16.gmra.mrb[0].mxu0 %v553
      %v592 = vpop.f32.mrb[0].mxu0
      %v593 = vadd.f32 0.0, %v592
      %v594 = vpop.f32.mrb[0].mxu0
      %v595 = vpop.f32.mrb[0].mxu0
      %v596 = vadd.f32 0.0, %v595
      %v597 = vpop.f32.mrb[0].mxu0
      %598 = vdwg.mxu0
      %v599 = vadd.f32 %v522, %v593
      %v600 = vadd.f32 %v523, %v596
      %v601 = vld [vmem:[#allocation6] sm:$0xff]
      %v602 = vshra.s32 %v601, 28
      %v603 = vand.u32 %v602, 15
      %v604 = vcvt.s32.f32 %v603
      %v605 = vld [vmem:[%s2 + $0x1] sm:$0x1]
      %v606 = vlaneseq
      %v607 = vshrl.u32 %v606, 7
      %v608 = vsub.s32 0, %v607
      %v609 = vrot.slane %v605, %v608
      %v610 = vmul.f32 %v609, %v604
      %v611 = vld [vmem:[%s3 + $0x1] sm:$0x1]
      %v612 = vlaneseq
      %v613 = vshrl.u32 %v612, 7
      %v614 = vsub.s32 0, %v613
      %v615 = vrot.slane %v611, %v614
      %v616 = vsub.f32 %v610, %v615
      %v617 = vpack.c.bf16 %v616, %v616
      %v619 = vrot.slane %v617, 4
      %621 = vst [vmem:[#allocation2 + $0x18] sm:$0xf0] %v619
      %v622 = vld [vmem:[#allocation3] sm:$0xf]
      %v623 = vld [vmem:[#allocation3 + $0x4] sm:$0xf]
      %v624 = vld [vmem:[#allocation2 + $0x18] sm:$0xf0]
      %v627 = vunpack.c.l.b16 %v622
      %v628 = vunpack.c.l.b16 %v623
      %v629 = vpack.c.b16 %v628, %v627
      %630 = vrot.lane.b32.xlu0 %v629, 72
      %v631 = vpop.permute.xlu0 %630
      %v633 = vrot.slane %v624, 4
      %v635 = vsel %vm105, %v631, 0
      %v638 = vsel %vm109, %v633, 0
      %640 = vmatprep.subr.bf16.mxu0 0
      %641 = vmatpush1.bf16.msra.mxu0 %v638
      %642 = vmatprep.subr.bf16.mxu0 0
      %643 = vmatpush1.bf16.msra.mxu0 0
      %644 = vmatprep.subr.bf16.mxu0 0
      %645 = vmatpush1.bf16.msra.mxu0 0
      %646 = vmatprep.subr.bf16.mxu0 0
      %647 = vmatpush1.bf16.msra.mxu0 0
      %648 = vmatprep.subr.bf16.mxu0 0
      %649 = vmatpush1.bf16.msra.mxu0 0
      %650 = vmatprep.subr.bf16.mxu0 0
      %651 = vmatpush1.bf16.msra.mxu0 0
      %652 = vmatprep.subr.bf16.mxu0 0
      %653 = vmatpush1.bf16.msra.mxu0 0
      %654 = vmatprep.subr.bf16.mxu0 0
      %655 = vmatpush1.bf16.msra.mxu0 0
      %656 = vmatprep.subr.bf16.mxu0 0
      %657 = vmatpush1.bf16.msra.mxu0 0
      %658 = vmatprep.subr.bf16.mxu0 0
      %659 = vmatpush1.bf16.msra.mxu0 0
      %660 = vmatprep.subr.bf16.mxu0 0
      %661 = vmatpush1.bf16.msra.mxu0 0
      %662 = vmatprep.subr.bf16.mxu0 0
      %663 = vmatpush1.bf16.msra.mxu0 0
      %664 = vmatprep.subr.bf16.mxu0 0
      %665 = vmatpush1.bf16.msra.mxu0 0
      %666 = vmatprep.subr.bf16.mxu0 0
      %667 = vmatpush1.bf16.msra.mxu0 0
      %668 = vmatprep.subr.bf16.mxu0 0
      %669 = vmatpush1.bf16.msra.mxu0 0
      %670 = vmatprep.subr.bf16.mxu0 0
      %671 = vmatpush1.bf16.msra.mxu0 0
      %672 = vmatprep.mubr.bf16.mxu0 0
      %673 = vmatmul.mubr.bf16.gmra.mrb[0].mxu0 %v635
      %v674 = vpop.f32.mrb[0].mxu0
      %v675 = vadd.f32 0.0, %v674
      %v676 = vpop.f32.mrb[0].mxu0
      %v677 = vpop.f32.mrb[0].mxu0
      %v678 = vadd.f32 0.0, %v677
      %v679 = vpop.f32.mrb[0].mxu0
      %680 = vdwg.mxu0
      %v681 = vadd.f32 %v599, %v675
      %v682 = vadd.f32 %v600, %v678
      %v683 = vld [vmem:[%s4] sm:$0x1]
      %v685 = vlaneseq
      %v686 = vshrl.u32 %v685, 7
      %v687 = vsub.s32 0, %v686
      %v688 = vrot.slane %v683, %v687
      %v690 = vadd.f32 %v681, %v688
      %v691 = vadd.f32 %v682, %v688
      %692 = vst [vmem:[#allocation8] sm:$0xff] %v690
      %693 = vst [vmem:[#allocation8 + $0x8] sm:$0xff] %v691
    $region33: #{tpu_custom_call.1} parent=1 // pred_fallthru
      _
    %p694 = scmp.ne.s32.totalorder 0, 0
    // Predicated region
    $region34: #{tpu_custom_call.1} parent=1 // pred_check
      %p695 = pneg %p694
    $region35: #{tpu_custom_call.1} parent=1 // pred_check_branch
      %697 = sbr.rel (%p695) target = $region37
    $region36: #{tpu_custom_call.1} parent=1 // pred_region
      %v698 = vld [vmem:[#allocation3] sm:$0xf]
      %v699 = vld [vmem:[#allocation3 + $0x4] sm:$0xf]
      %v700 = vld [vmem:[#allocation2] sm:$0xff]
      %v701 = vld [vmem:[#allocation2 + $0x8] sm:$0xff]
      %v702 = vld [vmem:[#allocation2 + $0x10] sm:$0xff]
      %v703 = vld [vmem:[#allocation2 + $0x18] sm:$0xff]
      %v704 = vld [vmem:[%s4] sm:$0x1]
      %v706 = vlaneseq
      %v707 = vshrl.u32 %v706, 7
      %v708 = vsub.s32 0, %v707
      %v709 = vrot.slane %v704, %v708
      %v713 = vunpack.c.l.b16 %v698
      %v714 = vunpack.c.l.b16 %v699
      %v715 = vpack.c.b16 %v714, %v713
      %vm716 = vcmask 523264
      %v718 = vsel %vm716, %v715, 0
      %720 = vmatprep.subr.bf16.mxu0 0
      %721 = vmatpush1.bf16.msra.mxu0 %v700
      %722 = vmatprep.subr.bf16.mxu0 0
      %723 = vmatpush1.bf16.msra.mxu0 %v701
      %724 = vmatprep.subr.bf16.mxu0 0
      %725 = vmatpush1.bf16.msra.mxu0 %v702
      %726 = vmatprep.subr.bf16.mxu0 0
      %727 = vmatpush1.bf16.msra.mxu0 %v703
      %728 = vmatprep.subr.bf16.mxu0 0
      %729 = vmatpush1.bf16.msra.mxu0 0
      %730 = vmatprep.subr.bf16.mxu0 0
      %731 = vmatpush1.bf16.msra.mxu0 0
      %732 = vmatprep.subr.bf16.mxu0 0
      %733 = vmatpush1.bf16.msra.mxu0 0
      %734 = vmatprep.subr.bf16.mxu0 0
      %735 = vmatpush1.bf16.msra.mxu0 0
      %736 = vmatprep.subr.bf16.mxu0 0
      %737 = vmatpush1.bf16.msra.mxu0 0
      %738 = vmatprep.subr.bf16.mxu0 0
      %739 = vmatpush1.bf16.msra.mxu0 0
      %740 = vmatprep.subr.bf16.mxu0 0
      %741 = vmatpush1.bf16.msra.mxu0 0
      %742 = vmatprep.subr.bf16.mxu0 0
      %743 = vmatpush1.bf16.msra.mxu0 0
      %744 = vmatprep.subr.bf16.mxu0 0
      %745 = vmatpush1.bf16.msra.mxu0 0
      %746 = vmatprep.subr.bf16.mxu0 0
      %747 = vmatpush1.bf16.msra.mxu0 0
      %748 = vmatprep.subr.bf16.mxu0 0
      %749 = vmatpush1.bf16.msra.mxu0 0
      %750 = vmatprep.subr.bf16.mxu0 0
      %751 = vmatpush1.bf16.msra.mxu0 0
      %752 = vmatprep.mubr.bf16.mxu0 0
      %753 = vmatmul.mubr.bf16.gmra.mrb[0].mxu0 %v718
      %v754 = vpop.f32.mrb[0].mxu0
      %v755 = vadd.f32 %v709, %v754
      %v756 = vpop.f32.mrb[0].mxu0
      %v757 = vpop.f32.mrb[0].mxu0
      %v758 = vadd.f32 %v709, %v757
      %v759 = vpop.f32.mrb[0].mxu0
      %760 = vdwg.mxu0
      %761 = vst [vmem:[#allocation8] sm:$0xff] %v755
      %762 = vst [vmem:[#allocation8 + $0x8] sm:$0xff] %v758
    $region37: #{tpu_custom_call.1} parent=1 // pred_fallthru
      _
    // Predicated region
    $region38: #{tpu_custom_call.1} parent=1 // pred_check
      _
    $region39: #{tpu_custom_call.1} parent=1 // pred_check_branch
      %764 = sbr.rel (0) target = $region41
    $region40: #{tpu_custom_call.1} parent=1 // pred_region
      %s766 = ssub.s32 256, 256
      %767 = vsyncadd [#allocation5], %s766
      %s768 = sshll.u32 [#allocation8], 4
      %s769 = int_to_ptr.vmem [resolvable:$true] %s768
      %774 = dma.vmem_to_hbm [thread:$0]  %s769, 256, %s5, [#allocation5], 128, 128, 8
    $region41: #{tpu_custom_call.1} parent=1 // pred_fallthru
      _
    // Predicated region
    $region42: #{tpu_custom_call.1} parent=1 // pred_check
      _
    $region43: #{tpu_custom_call.1} parent=1 // pred_check_branch
      %776 = sbr.rel (0) target = $region45
    $region44: #{tpu_custom_call.1} parent=1 // pred_region
      %777 = dma.done [#allocation5], 256
    $region45: #{tpu_custom_call.1} parent=1 // pred_fallthru
      _
    %778 = vsyncpa [#allocation4], 1
    %779 = vsyncpa [#allocation7], 1
    %780 = vsyncpa [#allocation5], 1

</llo_original>
